<compile_context>
chip_gen: v7x
topology: tpu7x:2x2x1
jax: 0.10.0
libtpu: 0.0.40
codegen_flags: <defaults>
</compile_context>

<pallas_src>
import jax
import jax.numpy as jnp
from jax.experimental import pallas as pl
from jax.experimental.pallas import tpu as pltpu


# ---------------------------------------------------------------------------
# Kernel 1: fused key/query + value projections (1x1 convs; BN, sim-scale and
# the output conv W folded in).  Runs once over the image, hoisted out of the
# attention key-stream loop.
# ---------------------------------------------------------------------------
def _proj_kernel(x_ref, wk_ref, bk_ref, wvw_ref, k_out_ref, v_out_ref):
    xb = x_ref[0]                                                      # (TP, Cin) bf16
    # shared key/query projection (conv + BN + Kc^-0.25 folded), pixel-major rows
    k = jnp.dot(xb, wk_ref[...], preferred_element_type=jnp.float32) + bk_ref[...]
    k_out_ref[0] = k.astype(jnp.bfloat16)                              # (TP, Kc)
    # value projection with output conv W folded in, channel-major columns
    v = jax.lax.dot_general(wvw_ref[...], xb, (((1,), (1,)), ((), ())),
                            preferred_element_type=jnp.float32)        # (Cout, TP)
    v_out_ref[0] = v.astype(jnp.bfloat16)


# ---------------------------------------------------------------------------
# Kernel 2: flash-attention-style online softmax over precomputed K / V.
# Transposed formulation: sim^T (TK, TQ), channel-major accumulator (Cout, TQ),
# output written directly in (B, Cout, HW) layout.
# ---------------------------------------------------------------------------
def _attn_kernel(q_ref, k_ref, v_ref, b_out_ref, out_ref, m_sc, l_sc, acc_sc):
    ki = pl.program_id(2)

    @pl.when(ki == 0)
    def _init():
        m_sc[...] = jnp.full_like(m_sc, -jnp.inf)
        l_sc[...] = jnp.zeros_like(l_sc)
        acc_sc[...] = jnp.zeros_like(acc_sc)

    # sim^T = K_tile @ Q_tile^T : (TK, TQ); both operands contract their last (Kc) dim.
    sim_t = jax.lax.dot_general(k_ref[0], q_ref[0], (((1,), (1,)), ((), ())),
                                preferred_element_type=jnp.float32)

    m_prev = m_sc[...]                                                 # (1, TQ)
    m_new = jnp.maximum(m_prev, jnp.max(sim_t, axis=0, keepdims=True))
    alpha = jnp.exp(m_prev - m_new)                                    # (1, TQ)
    p_t = jnp.exp(sim_t - m_new)                                       # (TK, TQ) f32
    l_sc[...] = alpha * l_sc[...] + jnp.sum(p_t, axis=0, keepdims=True)
    acc_sc[...] = alpha * acc_sc[...] + jnp.dot(
        v_ref[0], p_t.astype(jnp.bfloat16),
        preferred_element_type=jnp.float32)                            # (Cout, TQ)
    m_sc[...] = m_new

    @pl.when(ki == pl.num_programs(2) - 1)
    def _finalize():
        inv_l = pl.reciprocal(l_sc[...], approx=True)                  # (1, TQ)
        out_ref[0] = (acc_sc[...] * inv_l + b_out_ref[...]).astype(out_ref.dtype)


def init_params(key, in_ch, key_ch, val_ch, out_ch):
    ks = jax.random.split(key, 12)
    n = lambda k, s: (0.1 * jax.random.normal(k, s)).astype(jnp.float32)
    return dict(
        # shared f_key / f_query conv + BatchNorm (eval-mode running stats)
        wk=n(ks[0], (key_ch, in_ch)), bk=n(ks[1], (key_ch,)),
        gk=1.0 + n(ks[2], (key_ch,)), bk_bn=n(ks[3], (key_ch,)),
        rm=n(ks[4], (key_ch,)),
        rv=(1.0 + 0.5 * jnp.abs(jax.random.normal(ks[5], (key_ch,)))).astype(jnp.float32),
        # f_value conv
        wv=n(ks[6], (val_ch, in_ch)), bv=n(ks[7], (val_ch,)),
        # output conv W (random, not zero, init -- see TODO above)
        ww=n(ks[8], (out_ch, val_ch)), bw=n(ks[9], (out_ch,)),
    )


def self_attention_forward(x_nchw, params, key_channels, *,
                           tq=256, tk=512, tp=512, eps=1e-5):
    B, Cin, H, W = x_nchw.shape
    HW = H * W
    Kc = key_channels
    Cout = params['ww'].shape[0]

    def _clamp(t):
        t = min(t, HW)
        assert HW % t == 0 and (t % 128 == 0 or t == HW), \
            "spatial tile must divide HW and be a multiple of 128 (or equal HW)"
        return t

    tq, tk, tp = _clamp(tq), _clamp(tk), _clamp(tp)
    nq, nk, npj = HW // tq, HW // tk, HW // tp
    # Note for v7x megacore: keep B*nq >= 2 so both TensorCores get work.

    # (B, Cin, H, W) -> (B, HW, Cin) in bf16 (half the transpose HBM traffic).
    x_t = x_nchw.astype(jnp.bfloat16).reshape(B, Cin, HW).transpose(0, 2, 1)

    # Fold eval-mode BatchNorm into the shared key/query conv, and fold
    # sqrt(key_channels ** -0.5) into both weight and bias so Q.K carries the
    # full similarity scale with zero in-kernel work.
    s_bn = params['gk'] / jnp.sqrt(params['rv'] + eps)
    s_q = float(Kc) ** -0.25
    wk_eff = (params['wk'] * s_bn[:, None] * s_q).T.astype(jnp.bfloat16)      # (Cin, Kc)
    bk_eff = (((params['bk'] - params['rm']) * s_bn + params['bk_bn'])
              * s_q)[None, :].astype(jnp.float32)                             # (1, Kc)

    # Fold the output conv W into the value projection (channel-major):
    #   W(P @ V) = P @ ((Ww Wv) x)  +  (Ww bv + bw)     (softmax rows sum to 1)
    wvw_cm = (params['ww'] @ params['wv']).astype(jnp.bfloat16)               # (Cout, Cin)
    b_out = (params['ww'] @ params['bv']
             + params['bw'])[:, None].astype(jnp.float32)                     # (Cout, 1)

    # ---------------- pre-projection call ----------------
    proj_cost = pl.CostEstimate(
        flops=int(2 * B * HW * Cin * (Kc + Cout)),
        transcendentals=0,
        bytes_accessed=int(2 * B * HW * (Cin + Kc + Cout) + 2 * Cin * (Kc + Cout)),
    )
    k_arr, v_arr = pl.pallas_call(
        _proj_kernel,
        out_shape=(jax.ShapeDtypeStruct((B, HW, Kc), jnp.bfloat16),
                   jax.ShapeDtypeStruct((B, Cout, HW), jnp.bfloat16)),
        grid_spec=pltpu.PrefetchScalarGridSpec(
            num_scalar_prefetch=0,
            grid=(B, npj),
            in_specs=[
                pl.BlockSpec((1, tp, Cin), lambda b, pi: (b, pi, 0)),
                pl.BlockSpec((Cin, Kc), lambda b, pi: (0, 0)),
                pl.BlockSpec((1, Kc), lambda b, pi: (0, 0)),
                pl.BlockSpec((Cout, Cin), lambda b, pi: (0, 0)),
            ],
            out_specs=(pl.BlockSpec((1, tp, Kc), lambda b, pi: (b, pi, 0)),
                       pl.BlockSpec((1, Cout, tp), lambda b, pi: (b, 0, pi))),
        ),
        compiler_params=pltpu.CompilerParams(
            dimension_semantics=("parallel", "parallel")),
        cost_estimate=proj_cost,
    )(x_t, wk_eff, bk_eff, wvw_cm)

    # ---------------- attention call ----------------
    attn_cost = pl.CostEstimate(
        flops=int(2 * B * HW * HW * (Kc + Cout)),
        transcendentals=int(B * HW * HW),
        bytes_accessed=int(2 * B * HW * Kc                   # Q, read once per (b, qi)
                           + 2 * B * nq * HW * (Kc + Cout)   # K/V re-streamed per query tile
                           + 4 * B * HW * Cout),              # output
    )
    out = pl.pallas_call(
        _attn_kernel,
        out_shape=jax.ShapeDtypeStruct((B, Cout, HW), jnp.float32),
        grid_spec=pltpu.PrefetchScalarGridSpec(
            num_scalar_prefetch=0,
            grid=(B, nq, nk),
            in_specs=[
                pl.BlockSpec((1, tq, Kc), lambda b, qi, ki: (b, qi, 0)),    # Q rows
                pl.BlockSpec((1, tk, Kc), lambda b, qi, ki: (b, ki, 0)),    # K rows (streamed)
                pl.BlockSpec((1, Cout, tk), lambda b, qi, ki: (b, 0, ki)),  # V cols (streamed)
                pl.BlockSpec((Cout, 1), lambda b, qi, ki: (0, 0)),          # folded output bias
            ],
            out_specs=pl.BlockSpec((1, Cout, tq), lambda b, qi, ki: (b, 0, qi)),
            scratch_shapes=[
                pltpu.VMEM((1, tq), jnp.float32),      # m (running max)
                pltpu.VMEM((1, tq), jnp.float32),      # l (running denom)
                pltpu.VMEM((Cout, tq), jnp.float32),   # acc (channel-major numerator)
            ],
        ),
        compiler_params=pltpu.CompilerParams(
            dimension_semantics=("parallel", "parallel", "arbitrary")),
        cost_estimate=attn_cost,
    )(k_arr, k_arr, v_arr, b_out)

    # (B, Cout, HW) -> (B, Cout, H, W): pure reshape, no transpose.
    return out.reshape(B, Cout, H, W)


def ref_forward(x_nchw, p, key_ch, eps=1e-5):
    """Pure-JAX reference mirroring the PyTorch module (eval mode, scale=1)."""
    B, Cin, H, W = x_nchw.shape
    HW = H * W
    xf = x_nchw.reshape(B, Cin, HW).astype(jnp.float32)

    def conv1x1(t, w, b):  # t: (B, C, HW), w: (O, C)
        return jnp.einsum('oc,bch->boh', w, t) + b[None, :, None]

    key = conv1x1(xf, p['wk'], p['bk'])
    key = ((key - p['rm'][None, :, None]) / jnp.sqrt(p['rv'] + eps)[None, :, None]
           * p['gk'][None, :, None] + p['bk_bn'][None, :, None])          # (B, Kc, HW)
    value = conv1x1(xf, p['wv'], p['bv']).transpose(0, 2, 1)              # (B, HW, Vc)
    query = key.transpose(0, 2, 1)                                        # (B, HW, Kc)

    sim = jnp.einsum('bqc,bch->bqh', query, key) * (key_ch ** -0.5)
    sim = jax.nn.softmax(sim, axis=-1)
    ctx = jnp.einsum('bqh,bhv->bqv', sim, value)                          # (B, HW, Vc)
    ctx = conv1x1(ctx.transpose(0, 2, 1), p['ww'], p['bw'])               # (B, Cout, HW)
    return ctx.reshape(B, -1, H, W)


if __name__ == "__main__":
    B, Cin, H, W = 2, 4, 16, 16
    Kc, Vc = 8, 8
    Cout = Cin  # out_channels defaults to in_channels in the module

    key = jax.random.PRNGKey(0)
    kx, kp = jax.random.split(key)
    x = jax.random.normal(kx, (B, Cin, H, W), dtype=jnp.float32)
    params = init_params(kp, Cin, Kc, Vc, Cout)

    out = jax.block_until_ready(self_attention_forward(x, params, Kc))
    ref = jax.block_until_ready(ref_forward(x, params, Kc))

    assert out.shape == (B, Cout, H, W)
    max_err = float(jnp.max(jnp.abs(out - ref)))
    # Tolerance loosened for bf16 MXU inputs + approx softmax reciprocal.
    assert jnp.allclose(out, ref, atol=2e-2, rtol=2e-2), max_err
    print("KERNEL_OK")
</pallas_src>

<mosaic_0001>
module attributes {stable_mosaic.version = 11 : i64} {
  func.func @_proj_kernel(%arg0: i32, %arg1: i32, %arg2: memref<1x256x4xbf16, #tpu.memory_space<vmem>>, %arg3: memref<4x8xbf16, #tpu.memory_space<vmem>>, %arg4: memref<1x8xf32, #tpu.memory_space<vmem>>, %arg5: memref<4x4xbf16, #tpu.memory_space<vmem>>, %arg6: memref<1x256x8xbf16, #tpu.memory_space<vmem>>, %arg7: memref<1x4x256xbf16, #tpu.memory_space<vmem>>) attributes {dimension_semantics = [#tpu.dimension_semantics<parallel>, #tpu.dimension_semantics<parallel>], iteration_bounds = array<i64: 2, 1>, scalar_prefetch = 0 : i64, scratch_operands = 0 : i64, tpu.core_type = #tpu.core_type<tc>, window_params = [{transform_indices = @transform_0, window_bounds = array<i64: 1, 256, 4>}, {pipeline_mode = #tpu.pipeline_mode<synchronous>, transform_indices = @transform_1, window_bounds = array<i64: 4, 8>}, {pipeline_mode = #tpu.pipeline_mode<synchronous>, transform_indices = @transform_2, window_bounds = array<i64: 1, 8>}, {pipeline_mode = #tpu.pipeline_mode<synchronous>, transform_indices = @transform_3, window_bounds = array<i64: 4, 4>}, {transform_indices = @transform_4, window_bounds = array<i64: 1, 256, 8>}, {transform_indices = @transform_5, window_bounds = array<i64: 1, 4, 256>}]} {
    %c0 = arith.constant 0 : index
    %c0_0 = arith.constant 0 : index
    %c0_1 = arith.constant 0 : index
    %0 = vector.load %arg2[%c0, %c0_0, %c0_1] : memref<1x256x4xbf16, #tpu.memory_space<vmem>>, vector<1x256x4xbf16>
    %1 = vector.shape_cast %0 : vector<1x256x4xbf16> to vector<256x4xbf16>
    %c0_2 = arith.constant 0 : index
    %c0_3 = arith.constant 0 : index
    %2 = vector.load %arg3[%c0_2, %c0_3] : memref<4x8xbf16, #tpu.memory_space<vmem>>, vector<4x8xbf16>
    %cst = arith.constant dense<0.000000e+00> : vector<256x8xf32>
    %3 = tpu.matmul %1, %2, %cst {dimension_numbers = #tpu.dot_dimension_numbers<[1], [0], [0], [1], [0, 0, 1, 1], [], []>} : vector<256x4xbf16>, vector<4x8xbf16>, vector<256x8xf32> -> vector<256x8xf32>
    %c0_4 = arith.constant 0 : index
    %c0_5 = arith.constant 0 : index
    %4 = vector.load %arg4[%c0_4, %c0_5] : memref<1x8xf32, #tpu.memory_space<vmem>>, vector<1x8xf32>
    %5 = vector.broadcast %4 : vector<1x8xf32> to vector<256x8xf32>
    %6 = arith.addf %3, %5 : vector<256x8xf32>
    %7 = arith.truncf %6 : vector<256x8xf32> to vector<256x8xbf16>
    %c0_6 = arith.constant 0 : index
    %c0_7 = arith.constant 0 : index
    %c0_8 = arith.constant 0 : index
    %8 = vector.load %arg6[%c0_6, %c0_7, %c0_8] : memref<1x256x8xbf16, #tpu.memory_space<vmem>>, vector<1x256x8xbf16>
    %9 = vector.shape_cast %8 : vector<1x256x8xbf16> to vector<256x8xbf16>
    %10 = vector.shape_cast %7 : vector<256x8xbf16> to vector<1x256x8xbf16>
    tpu.vector_store %arg6[%c0_6, %c0_7, %c0_8], %10 {strides = array<i32>} : memref<1x256x8xbf16, #tpu.memory_space<vmem>>, vector<1x256x8xbf16>,
    %c0_9 = arith.constant 0 : index
    %c0_10 = arith.constant 0 : index
    %11 = vector.load %arg5[%c0_9, %c0_10] : memref<4x4xbf16, #tpu.memory_space<vmem>>, vector<4x4xbf16>
    %cst_11 = arith.constant dense<0.000000e+00> : vector<4x256xf32>
    %12 = tpu.matmul %11, %1, %cst_11 {dimension_numbers = #tpu.dot_dimension_numbers<[1], [1], [0], [0], [0, 0, 1, 0], [], []>} : vector<4x4xbf16>, vector<256x4xbf16>, vector<4x256xf32> -> vector<4x256xf32>
    %13 = arith.truncf %12 : vector<4x256xf32> to vector<4x256xbf16>
    %c0_12 = arith.constant 0 : index
    %c0_13 = arith.constant 0 : index
    %c0_14 = arith.constant 0 : index
    %14 = vector.load %arg7[%c0_12, %c0_13, %c0_14] : memref<1x4x256xbf16, #tpu.memory_space<vmem>>, vector<1x4x256xbf16>
    %15 = vector.shape_cast %14 : vector<1x4x256xbf16> to vector<4x256xbf16>
    %16 = vector.shape_cast %13 : vector<4x256xbf16> to vector<1x4x256xbf16>
    tpu.vector_store %arg7[%c0_12, %c0_13, %c0_14], %16 {strides = array<i32>} : memref<1x4x256xbf16, #tpu.memory_space<vmem>>, vector<1x4x256xbf16>,
    return
  }
  func.func @transform_0(%arg0: i32, %arg1: i32) -> (i32, i32, i32) {
    %c0_i32 = arith.constant 0 : i32
    %c0_i32_0 = arith.constant 0 : i32
    return %arg0, %arg1, %c0_i32 : i32, i32, i32
  }
  func.func @transform_1(%arg0: i32, %arg1: i32) -> (i32, i32) {
    %c0_i32 = arith.constant 0 : i32
    %c0_i32_0 = arith.constant 0 : i32
    %c0_i32_1 = arith.constant 0 : i32
    return %c0_i32, %c0_i32_0 : i32, i32
  }
  func.func @transform_2(%arg0: i32, %arg1: i32) -> (i32, i32) {
    %c0_i32 = arith.constant 0 : i32
    %c0_i32_0 = arith.constant 0 : i32
    %c0_i32_1 = arith.constant 0 : i32
    return %c0_i32, %c0_i32_0 : i32, i32
  }
  func.func @transform_3(%arg0: i32, %arg1: i32) -> (i32, i32) {
    %c0_i32 = arith.constant 0 : i32
    %c0_i32_0 = arith.constant 0 : i32
    %c0_i32_1 = arith.constant 0 : i32
    return %c0_i32, %c0_i32_0 : i32, i32
  }
  func.func @transform_4(%arg0: i32, %arg1: i32) -> (i32, i32, i32) {
    %c0_i32 = arith.constant 0 : i32
    %c0_i32_0 = arith.constant 0 : i32
    return %arg0, %arg1, %c0_i32 : i32, i32, i32
  }
  func.func @transform_5(%arg0: i32, %arg1: i32) -> (i32, i32, i32) {
    %c0_i32 = arith.constant 0 : i32
    %c0_i32_0 = arith.constant 0 : i32
    return %arg0, %c0_i32, %arg1 : i32, i32, i32
  }
}

</mosaic_0001>

<llo_original>
// kernel: tpu_custom_call.1
$region0: #{tpu_custom_call.1}
  #allocation0 [shape = 'u32[]', space=smem, size = 0x4, offset = 0x4, fixed_abs, tag = 'smem constant byte address 0x4 - core index']
  #allocation1 [shape = 'u32[144,128]{1,0:T(1,128)}', space=vmem, size = 0x12000, scoped, tag = 'internal scratch']
  %s0 = inlined_call_operand.vmem [shape: bf16[2,256,4], index: 0, kind: input, shape index: {}]
  %s1 = inlined_call_operand.vmem [shape: bf16[4,8], index: 1, kind: input, shape index: {}]
  %s2 = inlined_call_operand.vmem [shape: f32[1,8], index: 2, kind: input, shape index: {}]
  %s3 = inlined_call_operand.vmem [shape: bf16[4,4], index: 3, kind: input, shape index: {}]
  %s4 = inlined_call_operand.vmem [shape: bf16[2,256,8], index: 4, kind: output, shape index: {0}]
  %s5 = inlined_call_operand.hbm [shape: bf16[2,4,256], index: 5, kind: output, shape index: {1}]
  %6 = xla_tuple %s4, %s5
  %s7 = sld [smem:[#allocation0]]
  $region57: #{tpu_custom_call.1} parent=0
    _
  %s9 = ssub.s32 1, %s7
  %s10 = scalar_select 0, %s9, %s7
  $region1: #{tpu_custom_call.1} parent=0
    #allocation2 [shape = 'u8[4096]{0}', space=vmem, size = 0x1000, scoped, tag = 'output window, operand 1']
    #allocation3 [shape = 's32[2]{0}', space=sflag, size = 0x8, scoped, tag = 'scoped memory for tpu_custom_call.1']
    %11 = vsyncpa [#allocation3], 0
    %s12 = scalar_lea.sflag [#allocation3], 1
    %13 = vsyncpa %s12, 0
    loop: start=0, step=1, limit=4
    $region2: #{tpu_custom_call.1} parent=1 // loop_pre_header
      _
    $region3: #{tpu_custom_call.1} parent=1 // loop_header
      %s15 = sphi 0, %s19
      %p16 = scmp.ge.s32.totalorder %s15, 4
      %s22 = sphi 0, %s34
      %s23 = sphi 0, %s30
      %s24 = sphi 0, %s22
      %s25 = sphi 0, %s23
      %s26 = sphi 0, %s24
      %s27 = sphi 0, %s25
      %s39 = sphi 0, %s41
      %s42 = sphi 0, %s39
      %s43 = sphi 0, %s42
      %s59 = sphi 0, %s43
      %s63 = sphi 0, %s63
      %s65 = sphi 0, %s63
      %s66 = sphi 0, %s65
      %s80 = sphi 0, %s66
      %s84 = sphi 0, %s84
      %s86 = sphi 0, %s84
      %s87 = sphi 0, %s86
      %s101 = sphi 0, %s87
      %s105 = sphi 0, %s105
      %s107 = sphi 0, %s105
      %s108 = sphi 0, %s107
      %s122 = sphi 0, %s108
      %s130 = sphi 0, %s132
      %s133 = sphi 0, %s130
      %s134 = sphi 0, %s133
      %s150 = sphi 0, %s134
      %s158 = sphi 0, %s160
      %s161 = sphi 0, %s158
      %s162 = sphi 0, %s161
      %s178 = sphi 0, %s162
    $region4: #{tpu_custom_call.1} parent=1 // loop_header_branch
      %18 = sbr.rel (%p16) target = $region8
    $region5: #{tpu_custom_call.1} parent=1 // loop_body
      %s20 = ssub.s32 %s15, 1
      %s21 = ssub.s32 %s15, 2
      %s28 = sadd.s32 1, %s23
      %p29 = scmp.ge.s32.totalorder %s28, 1
      %s30 = scalar_select %p29, 0, %s28
      %s31 = sadd.s32 1, %s22
      %s32 = scalar_select %p29, %s31, %s22
      %p33 = scmp.ge.s32.totalorder %s32, 2
      %s34 = scalar_select %p33, 0, %s32
      %s35 = ssub.s32 %s22, %s34
      %s36 = ssub.s32 %s23, %s30
      %s37 = sor.u32 %s35, %s36
      %p38 = scmp.eq.s32.totalorder %s37, 0
      %s40 = sadd.s32 %s39, 1
      %s41 = scalar_select %p38, %s39, %s40
      %p44 = pneg %p38
      %p45 = scmp.eq.s32.totalorder %s15, 1
      %p46 = por %p44, %p45
      %p47 = scmp.ne.s32.totalorder %s39, %s42
      %p48 = scmp.eq.s32.totalorder %s15, 0
      %p49 = por %p47, %p48
      %p50 = scmp.ne.s32.totalorder %s39, %s42
      %p51 = scmp.eq.s32.totalorder %s20, 1
      %p52 = por %p50, %p51
      %p53 = scmp.ne.s32.totalorder %s42, %s43
      %p54 = scmp.eq.s32.totalorder %s20, 0
      %p55 = por %p53, %p54
      %p56 = scmp.ne.s32.totalorder %s42, %s43
      %p57 = scmp.eq.s32.totalorder %s21, 1
      %p58 = por %p56, %p57
      %p60 = scmp.ne.s32.totalorder %s43, %s59
      %p61 = scmp.eq.s32.totalorder %s21, 0
      %p62 = por %p60, %p61
      %s64 = sadd.s32 %s63, 1
      %p67 = scmp.eq.s32.totalorder %s15, 1
      %p68 = scmp.ne.s32.totalorder %s63, %s65
      %p69 = scmp.eq.s32.totalorder %s15, 0
      %p70 = por %p68, %p69
      %p71 = scmp.ne.s32.totalorder %s63, %s65
      %p72 = scmp.eq.s32.totalorder %s20, 1
      %p73 = por %p71, %p72
      %p74 = scmp.ne.s32.totalorder %s65, %s66
      %p75 = scmp.eq.s32.totalorder %s20, 0
      %p76 = por %p74, %p75
      %p77 = scmp.ne.s32.totalorder %s65, %s66
      %p78 = scmp.eq.s32.totalorder %s21, 1
      %p79 = por %p77, %p78
      %p81 = scmp.ne.s32.totalorder %s66, %s80
      %p82 = scmp.eq.s32.totalorder %s21, 0
      %p83 = por %p81, %p82
      %s85 = sadd.s32 %s84, 1
      %p88 = scmp.eq.s32.totalorder %s15, 1
      %p89 = scmp.ne.s32.totalorder %s84, %s86
      %p90 = scmp.eq.s32.totalorder %s15, 0
      %p91 = por %p89, %p90
      %p92 = scmp.ne.s32.totalorder %s84, %s86
      %p93 = scmp.eq.s32.totalorder %s20, 1
      %p94 = por %p92, %p93
      %p95 = scmp.ne.s32.totalorder %s86, %s87
      %p96 = scmp.eq.s32.totalorder %s20, 0
      %p97 = por %p95, %p96
      %p98 = scmp.ne.s32.totalorder %s86, %s87
      %p99 = scmp.eq.s32.totalorder %s21, 1
      %p100 = por %p98, %p99
      %p102 = scmp.ne.s32.totalorder %s87, %s101
      %p103 = scmp.eq.s32.totalorder %s21, 0
      %p104 = por %p102, %p103
      %s106 = sadd.s32 %s105, 1
      %p109 = scmp.eq.s32.totalorder %s15, 1
      %p110 = scmp.ne.s32.totalorder %s105, %s107
      %p111 = scmp.eq.s32.totalorder %s15, 0
      %p112 = por %p110, %p111
      %p113 = scmp.ne.s32.totalorder %s105, %s107
      %p114 = scmp.eq.s32.totalorder %s20, 1
      %p115 = por %p113, %p114
      %p116 = scmp.ne.s32.totalorder %s107, %s108
      %p117 = scmp.eq.s32.totalorder %s20, 0
      %p118 = por %p116, %p117
      %p119 = scmp.ne.s32.totalorder %s107, %s108
      %p120 = scmp.eq.s32.totalorder %s21, 1
      %p121 = por %p119, %p120
      %p123 = scmp.ne.s32.totalorder %s108, %s122
      %p124 = scmp.eq.s32.totalorder %s21, 0
      %p125 = por %p123, %p124
      %s126 = ssub.s32 %s22, %s34
      %s127 = ssub.s32 %s23, %s30
      %s128 = sor.u32 %s126, %s127
      %p129 = scmp.eq.s32.totalorder %s128, 0
      %s131 = sadd.s32 %s130, 1
      %s132 = scalar_select %p129, %s130, %s131
      %p135 = pneg %p129
      %p136 = scmp.eq.s32.totalorder %s15, 1
      %p137 = por %p135, %p136
      %p138 = scmp.ne.s32.totalorder %s130, %s133
      %p139 = scmp.eq.s32.totalorder %s15, 0
      %p140 = por %p138, %p139
      %p141 = scmp.ne.s32.totalorder %s130, %s133
      %p142 = scmp.eq.s32.totalorder %s20, 1
      %p143 = por %p141, %p142
      %p144 = scmp.ne.s32.totalorder %s133, %s134
      %p145 = scmp.eq.s32.totalorder %s20, 0
      %p146 = por %p144, %p145
      %p147 = scmp.ne.s32.totalorder %s133, %s134
      %p148 = scmp.eq.s32.totalorder %s21, 1
      %p149 = por %p147, %p148
      %p151 = scmp.ne.s32.totalorder %s134, %s150
      %p152 = scmp.eq.s32.totalorder %s21, 0
      %p153 = por %p151, %p152
      %s154 = ssub.s32 %s22, %s34
      %s155 = ssub.s32 %s23, %s30
      %s156 = sor.u32 %s154, %s155
      %p157 = scmp.eq.s32.totalorder %s156, 0
      %s159 = sadd.s32 %s158, 1
      %s160 = scalar_select %p157, %s158, %s159
      %p163 = pneg %p157
      %p164 = scmp.eq.s32.totalorder %s15, 1
      %p165 = por %p163, %p164
      %p166 = scmp.ne.s32.totalorder %s158, %s161
      %p167 = scmp.eq.s32.totalorder %s15, 0
      %p168 = por %p166, %p167
      %p169 = scmp.ne.s32.totalorder %s158, %s161
      %p170 = scmp.eq.s32.totalorder %s20, 1
      %p171 = por %p169, %p170
      %p172 = scmp.ne.s32.totalorder %s161, %s162
      %p173 = scmp.eq.s32.totalorder %s20, 0
      %p174 = por %p172, %p173
      %p175 = scmp.ne.s32.totalorder %s161, %s162
      %p176 = scmp.eq.s32.totalorder %s21, 1
      %p177 = por %p175, %p176
      %p179 = scmp.ne.s32.totalorder %s162, %s178
      %p180 = scmp.eq.s32.totalorder %s21, 0
      %p181 = por %p179, %p180
      %p182 = scmp.le.s32.totalorder 1, %s15
      %p183 = scmp.lt.s32.totalorder %s15, 3
      %p184 = pnand %p182, %p183
      %p185 = pneg %p184
      // Predicated region
      $region9: #{tpu_custom_call.1} parent=5 // pred_check
        _
      $region10: #{tpu_custom_call.1} parent=5 // pred_check_branch
        %187 = sbr.rel (%p184) target = $region12
      $region11: #{tpu_custom_call.1} parent=5 // pred_region
        %s188 = ssub.s32 %s15, 1
        // Predicated region
        $region13: #{tpu_custom_call.1} parent=11 // pred_check
          %p189 = pneg %p76
        $region14: #{tpu_custom_call.1} parent=11 // pred_check_branch
          %191 = sbr.rel (%p189) target = $region16
        $region15: #{tpu_custom_call.1} parent=11 // pred_region
          _
        $region16: #{tpu_custom_call.1} parent=11 // pred_fallthru
          _
        // Predicated region
        $region17: #{tpu_custom_call.1} parent=11 // pred_check
          %p192 = pneg %p97
        $region18: #{tpu_custom_call.1} parent=11 // pred_check_branch
          %194 = sbr.rel (%p192) target = $region20
        $region19: #{tpu_custom_call.1} parent=11 // pred_region
          _
        $region20: #{tpu_custom_call.1} parent=11 // pred_fallthru
          _
        // Predicated region
        $region21: #{tpu_custom_call.1} parent=11 // pred_check
          %p195 = pneg %p118
        $region22: #{tpu_custom_call.1} parent=11 // pred_check_branch
          %197 = sbr.rel (%p195) target = $region24
        $region23: #{tpu_custom_call.1} parent=11 // pred_region
          _
        $region24: #{tpu_custom_call.1} parent=11 // pred_fallthru
          _
      $region12: #{tpu_custom_call.1} parent=5 // pred_fallthru
        _
      %p198 = scmp.lt.s32.totalorder %s15, 2
      // Predicated region
      $region25: #{tpu_custom_call.1} parent=5 // pred_check
        %p199 = pneg %p198
      $region26: #{tpu_custom_call.1} parent=5 // pred_check_branch
        %201 = sbr.rel (%p199) target = $region28
      $region27: #{tpu_custom_call.1} parent=5 // pred_region
        // Predicated region
        $region29: #{tpu_custom_call.1} parent=27 // pred_check
          %p202 = pneg %p49
        $region30: #{tpu_custom_call.1} parent=27 // pred_check_branch
          %204 = sbr.rel (%p202) target = $region32
        $region31: #{tpu_custom_call.1} parent=27 // pred_region
          %s205 = smul.u32 32, %s23
          %p206 = scmp.lt.s32.totalorder %s22, 1
          %s207 = scalar_select %p206, %s22, 1
          %p208 = scmp.lt.s32.totalorder %s205, 31
          %s209 = scalar_select %p208, %s205, 31
          %s210 = smul.addr %s207, 32
          %s211 = sadd.s32 %s209, %s210
          %s212 = smul.addr %s211, 4
          %s213 = scalar_lea.vmem %s0, %s212
          %s214 = smul.u32 32, %s23
        $region32: #{tpu_custom_call.1} parent=27 // pred_fallthru
          _
      $region28: #{tpu_custom_call.1} parent=5 // pred_fallthru
        _
      %p215 = scmp.le.s32.totalorder 1, %s15
      %p216 = scmp.lt.s32.totalorder %s15, 3
      %p217 = pnand %p215, %p216
      %p218 = pneg %p217
      // Predicated region
      $region33: #{tpu_custom_call.1} parent=5 // pred_check
        _
      $region34: #{tpu_custom_call.1} parent=5 // pred_check_branch
        %220 = sbr.rel (%p217) target = $region36
      $region35: #{tpu_custom_call.1} parent=5 // pred_region
        %s221 = ssub.s32 %s15, 1
        %s222 = smul.u32 32, %s25
        %p223 = scmp.lt.s32.totalorder %s24, 1
        %s224 = scalar_select %p223, %s24, 1
        %p225 = scmp.lt.s32.totalorder %s222, 31
        %s226 = scalar_select %p225, %s222, 31
        %s227 = smul.addr %s224, 32
        %s228 = sadd.s32 %s226, %s227
        %s229 = smul.addr %s228, 4
        %s230 = scalar_lea.vmem %s0, %s229
        %p231 = pneg %p55
        %p232 = pneg %p52
        %p233 = pneg %p76
        %p234 = pneg %p73
        %p235 = pneg %p97
        %p236 = pneg %p94
        %p237 = pneg %p118
        %p238 = pneg %p115
        %p239 = pneg %p146
        %p240 = pneg %p143
        %s241 = smul.u32 32, %s25
        %p242 = scmp.lt.s32.totalorder %s24, 1
        %s243 = scalar_select %p242, %s24, 1
        %p244 = scmp.lt.s32.totalorder %s241, 31
        %s245 = scalar_select %p244, %s241, 31
        %s246 = smul.addr %s243, 32
        %s247 = sadd.s32 %s245, %s246
        %s248 = smul.addr %s247, 4
        %s249 = scalar_lea.vmem %s4, %s248
        %p250 = pneg %p174
        %p251 = pneg %p171
        %s252 = sand.u32 %s161, 1
        %s253 = scalar_lea.sflag [#allocation3], %s252
        %s254 = sand.u32 %s161, 1
        %s255 = smul.addr %s254, 4
        %s256 = scalar_lea.vmem [#allocation2], %s255
        %s257 = smul.u32 32, %s25
        %p258 = scmp.lt.s32.totalorder %s24, 1
        %s259 = scalar_select %p258, %s24, 1
        %p260 = scmp.lt.s32.totalorder %s257, 31
        %s261 = scalar_select %p260, %s257, 31
        %s262 = smul.addr %s259, 32
        %s263 = sadd.s32 %s261, %s262
        %s264 = smul.addr %s263, 4
        %s265 = scalar_lea.vmem %s0, %s264
        %s266 = smul.u32 32, %s25
        %s267 = smul.u32 32, %s25
        %p268 = scmp.lt.s32.totalorder %s24, 1
        %s269 = scalar_select %p268, %s24, 1
        %p270 = scmp.lt.s32.totalorder %s267, 31
        %s271 = scalar_select %p270, %s267, 31
        %s272 = smul.addr %s269, 32
        %s273 = sadd.s32 %s271, %s272
        %s274 = smul.addr %s273, 4
        %s275 = scalar_lea.vmem %s4, %s274
        %s276 = smul.u32 32, %s25
        %s277 = smul.u32 2, %s25
        %v279 = vld [vmem:[%s265] sm:$0xf]
        %v280 = vld [vmem:[%s265 + $0x4] sm:$0xf]
        %v281 = vld [vmem:[%s265 + $0x8] sm:$0xf]
        %v282 = vld [vmem:[%s265 + $0xc] sm:$0xf]
        %v283 = vld [vmem:[%s265 + $0x10] sm:$0xf]
        %v284 = vld [vmem:[%s265 + $0x14] sm:$0xf]
        %v285 = vld [vmem:[%s265 + $0x18] sm:$0xf]
        %v286 = vld [vmem:[%s265 + $0x1c] sm:$0xf]
        %v287 = vld [vmem:[%s265 + $0x20] sm:$0xf]
        %v288 = vld [vmem:[%s265 + $0x24] sm:$0xf]
        %v289 = vld [vmem:[%s265 + $0x28] sm:$0xf]
        %v290 = vld [vmem:[%s265 + $0x2c] sm:$0xf]
        %v291 = vld [vmem:[%s265 + $0x30] sm:$0xf]
        %v292 = vld [vmem:[%s265 + $0x34] sm:$0xf]
        %v293 = vld [vmem:[%s265 + $0x38] sm:$0xf]
        %v294 = vld [vmem:[%s265 + $0x3c] sm:$0xf]
        %v295 = vld [vmem:[%s265 + $0x40] sm:$0xf]
        %v296 = vld [vmem:[%s265 + $0x44] sm:$0xf]
        %v297 = vld [vmem:[%s265 + $0x48] sm:$0xf]
        %v298 = vld [vmem:[%s265 + $0x4c] sm:$0xf]
        %v299 = vld [vmem:[%s265 + $0x50] sm:$0xf]
        %v300 = vld [vmem:[%s265 + $0x54] sm:$0xf]
        %v301 = vld [vmem:[%s265 + $0x58] sm:$0xf]
        %v302 = vld [vmem:[%s265 + $0x5c] sm:$0xf]
        %v303 = vld [vmem:[%s265 + $0x60] sm:$0xf]
        %v304 = vld [vmem:[%s265 + $0x64] sm:$0xf]
        %v305 = vld [vmem:[%s265 + $0x68] sm:$0xf]
        %v306 = vld [vmem:[%s265 + $0x6c] sm:$0xf]
        %v307 = vld [vmem:[%s265 + $0x70] sm:$0xf]
        %v308 = vld [vmem:[%s265 + $0x74] sm:$0xf]
        %v309 = vld [vmem:[%s265 + $0x78] sm:$0xf]
        %v310 = vld [vmem:[%s265 + $0x7c] sm:$0xf]
        %v311 = vld [vmem:[%s1] sm:$0x3]
        %v312 = vld [vmem:[%s2] sm:$0x1]
        %v314 = vlaneseq
        %v315 = vshrl.u32 %v314, 7
        %v316 = vsub.s32 0, %v315
        %v317 = vrot.slane %v312, %v316
        %v351 = vunpack.c.l.b16 %v279
        %v352 = vunpack.c.l.b16 %v280
        %v353 = vunpack.c.l.b16 %v281
        %v354 = vunpack.c.l.b16 %v282
        %v355 = vunpack.c.l.b16 %v283
        %v356 = vunpack.c.l.b16 %v284
        %v357 = vunpack.c.l.b16 %v285
        %v358 = vunpack.c.l.b16 %v286
        %v359 = vunpack.c.l.b16 %v287
        %v360 = vunpack.c.l.b16 %v288
        %v361 = vunpack.c.l.b16 %v289
        %v362 = vunpack.c.l.b16 %v290
        %v363 = vunpack.c.l.b16 %v291
        %v364 = vunpack.c.l.b16 %v292
        %v365 = vunpack.c.l.b16 %v293
        %v366 = vunpack.c.l.b16 %v294
        %v367 = vunpack.c.l.b16 %v295
        %v368 = vunpack.c.l.b16 %v296
        %v369 = vunpack.c.l.b16 %v297
        %v370 = vunpack.c.l.b16 %v298
        %v371 = vunpack.c.l.b16 %v299
        %v372 = vunpack.c.l.b16 %v300
        %v373 = vunpack.c.l.b16 %v301
        %v374 = vunpack.c.l.b16 %v302
        %v375 = vunpack.c.l.b16 %v303
        %v376 = vunpack.c.l.b16 %v304
        %v377 = vunpack.c.l.b16 %v305
        %v378 = vunpack.c.l.b16 %v306
        %v379 = vunpack.c.l.b16 %v307
        %v380 = vunpack.c.l.b16 %v308
        %v381 = vunpack.c.l.b16 %v309
        %v382 = vunpack.c.l.b16 %v310
        %v383 = vpack.c.b16 %v352, %v351
        %v384 = vpack.c.b16 %v354, %v353
        %v385 = vpack.c.b16 %v356, %v355
        %v386 = vpack.c.b16 %v358, %v357
        %v387 = vpack.c.b16 %v360, %v359
        %v388 = vpack.c.b16 %v362, %v361
        %v389 = vpack.c.b16 %v364, %v363
        %v390 = vpack.c.b16 %v366, %v365
        %v391 = vpack.c.b16 %v368, %v367
        %v392 = vpack.c.b16 %v370, %v369
        %v393 = vpack.c.b16 %v372, %v371
        %v394 = vpack.c.b16 %v374, %v373
        %v395 = vpack.c.b16 %v376, %v375
        %v396 = vpack.c.b16 %v378, %v377
        %v397 = vpack.c.b16 %v380, %v379
        %v398 = vpack.c.b16 %v382, %v381
        %vm399 = vcmask 31744
        %v401 = vsel %vm399, %v383, 0
        %v404 = vsel %vm399, %v384, 0
        %v407 = vsel %vm399, %v385, 0
        %v410 = vsel %vm399, %v386, 0
        %v413 = vsel %vm399, %v387, 0
        %v416 = vsel %vm399, %v388, 0
        %v419 = vsel %vm399, %v389, 0
        %v422 = vsel %vm399, %v390, 0
        %v425 = vsel %vm399, %v391, 0
        %v428 = vsel %vm399, %v392, 0
        %v431 = vsel %vm399, %v393, 0
        %v434 = vsel %vm399, %v394, 0
        %v437 = vsel %vm399, %v395, 0
        %v440 = vsel %vm399, %v396, 0
        %v443 = vsel %vm399, %v397, 0
        %v446 = vsel %vm399, %v398, 0
        %vm448 = vcmask 1041408
        %v450 = vsel %vm448, %v311, 0
        %452 = vmatprep.subr.bf16.mxu0 0
        %453 = vmatpush1.bf16.msra.mxu0 %v450
        %454 = vmatprep.subr.bf16.mxu0 0
        %455 = vmatpush1.bf16.msra.mxu0 0
        %456 = vmatprep.subr.bf16.mxu0 0
        %457 = vmatpush1.bf16.msra.mxu0 0
        %458 = vmatprep.subr.bf16.mxu0 0
        %459 = vmatpush1.bf16.msra.mxu0 0
        %460 = vmatprep.subr.bf16.mxu0 0
        %461 = vmatpush1.bf16.msra.mxu0 0
        %462 = vmatprep.subr.bf16.mxu0 0
        %463 = vmatpush1.bf16.msra.mxu0 0
        %464 = vmatprep.subr.bf16.mxu0 0
        %465 = vmatpush1.bf16.msra.mxu0 0
        %466 = vmatprep.subr.bf16.mxu0 0
        %467 = vmatpush1.bf16.msra.mxu0 0
        %468 = vmatprep.subr.bf16.mxu0 0
        %469 = vmatpush1.bf16.msra.mxu0 0
        %470 = vmatprep.subr.bf16.mxu0 0
        %471 = vmatpush1.bf16.msra.mxu0 0
        %472 = vmatprep.subr.bf16.mxu0 0
        %473 = vmatpush1.bf16.msra.mxu0 0
        %474 = vmatprep.subr.bf16.mxu0 0
        %475 = vmatpush1.bf16.msra.mxu0 0
        %476 = vmatprep.subr.bf16.mxu0 0
        %477 = vmatpush1.bf16.msra.mxu0 0
        %478 = vmatprep.subr.bf16.mxu0 0
        %479 = vmatpush1.bf16.msra.mxu0 0
        %480 = vmatprep.subr.bf16.mxu0 0
        %481 = vmatpush1.bf16.msra.mxu0 0
        %482 = vmatprep.subr.bf16.mxu0 0
        %483 = vmatpush1.bf16.msra.mxu0 0
        %484 = vmatprep.mubr.bf16.mxu0 0
        %485 = vmatmul.mubr.bf16.gmra.mrb[0].mxu0 %v401
        %v486 = vpop.f32.mrb[0].mxu0
        %v487 = vadd.f32 %v317, %v486
        %v488 = vpop.f32.mrb[0].mxu0
        %v489 = vpop.f32.mrb[0].mxu0
        %v490 = vadd.f32 %v317, %v489
        %v491 = vpop.f32.mrb[0].mxu0
        %492 = vmatprep.mubr.bf16.mxu0 0
        %493 = vmatmul.mubr.bf16.gmra.mrb[0].mxu0 %v404
        %v494 = vpop.f32.mrb[0].mxu0
        %v495 = vadd.f32 %v317, %v494
        %v496 = vpop.f32.mrb[0].mxu0
        %v497 = vpop.f32.mrb[0].mxu0
        %v498 = vadd.f32 %v317, %v497
        %v499 = vpop.f32.mrb[0].mxu0
        %500 = vmatprep.mubr.bf16.mxu0 0
        %501 = vmatmul.mubr.bf16.gmra.mrb[0].mxu0 %v407
        %v502 = vpop.f32.mrb[0].mxu0
        %v503 = vadd.f32 %v317, %v502
        %v504 = vpop.f32.mrb[0].mxu0
        %v505 = vpop.f32.mrb[0].mxu0
        %v506 = vadd.f32 %v317, %v505
        %v507 = vpop.f32.mrb[0].mxu0
        %508 = vmatprep.mubr.bf16.mxu0 0
        %509 = vmatmul.mubr.bf16.gmra.mrb[0].mxu0 %v410
        %v510 = vpop.f32.mrb[0].mxu0
        %v511 = vadd.f32 %v317, %v510
        %v512 = vpop.f32.mrb[0].mxu0
        %v513 = vpop.f32.mrb[0].mxu0
        %v514 = vadd.f32 %v317, %v513
        %v515 = vpop.f32.mrb[0].mxu0
        %516 = vmatprep.mubr.bf16.mxu0 0
        %517 = vmatmul.mubr.bf16.gmra.mrb[0].mxu0 %v413
        %v518 = vpop.f32.mrb[0].mxu0
        %v519 = vadd.f32 %v317, %v518
        %v520 = vpop.f32.mrb[0].mxu0
        %v521 = vpop.f32.mrb[0].mxu0
        %v522 = vadd.f32 %v317, %v521
        %v523 = vpop.f32.mrb[0].mxu0
        %524 = vmatprep.mubr.bf16.mxu0 0
        %525 = vmatmul.mubr.bf16.gmra.mrb[0].mxu0 %v416
        %v526 = vpop.f32.mrb[0].mxu0
        %v527 = vadd.f32 %v317, %v526
        %v528 = vpop.f32.mrb[0].mxu0
        %v529 = vpop.f32.mrb[0].mxu0
        %v530 = vadd.f32 %v317, %v529
        %v531 = vpop.f32.mrb[0].mxu0
        %532 = vmatprep.mubr.bf16.mxu0 0
        %533 = vmatmul.mubr.bf16.gmra.mrb[0].mxu0 %v419
        %v534 = vpop.f32.mrb[0].mxu0
        %v535 = vadd.f32 %v317, %v534
        %v536 = vpop.f32.mrb[0].mxu0
        %v537 = vpop.f32.mrb[0].mxu0
        %v538 = vadd.f32 %v317, %v537
        %v539 = vpop.f32.mrb[0].mxu0
        %540 = vmatprep.mubr.bf16.mxu0 0
        %541 = vmatmul.mubr.bf16.gmra.mrb[0].mxu0 %v422
        %v542 = vpop.f32.mrb[0].mxu0
        %v543 = vadd.f32 %v317, %v542
        %v544 = vpop.f32.mrb[0].mxu0
        %v545 = vpop.f32.mrb[0].mxu0
        %v546 = vadd.f32 %v317, %v545
        %v547 = vpop.f32.mrb[0].mxu0
        %548 = vmatprep.mubr.bf16.mxu0 0
        %549 = vmatmul.mubr.bf16.gmra.mrb[0].mxu0 %v425
        %v550 = vpop.f32.mrb[0].mxu0
        %v551 = vadd.f32 %v317, %v550
        %v552 = vpop.f32.mrb[0].mxu0
        %v553 = vpop.f32.mrb[0].mxu0
        %v554 = vadd.f32 %v317, %v553
        %v555 = vpop.f32.mrb[0].mxu0
        %556 = vmatprep.mubr.bf16.mxu0 0
        %557 = vmatmul.mubr.bf16.gmra.mrb[0].mxu0 %v428
        %v558 = vpop.f32.mrb[0].mxu0
        %v559 = vadd.f32 %v317, %v558
        %v560 = vpop.f32.mrb[0].mxu0
        %v561 = vpop.f32.mrb[0].mxu0
        %v562 = vadd.f32 %v317, %v561
        %v563 = vpop.f32.mrb[0].mxu0
        %564 = vmatprep.mubr.bf16.mxu0 0
        %565 = vmatmul.mubr.bf16.gmra.mrb[0].mxu0 %v431
        %v566 = vpop.f32.mrb[0].mxu0
        %v567 = vadd.f32 %v317, %v566
        %v568 = vpop.f32.mrb[0].mxu0
        %v569 = vpop.f32.mrb[0].mxu0
        %v570 = vadd.f32 %v317, %v569
        %v571 = vpop.f32.mrb[0].mxu0
        %572 = vmatprep.mubr.bf16.mxu0 0
        %573 = vmatmul.mubr.bf16.gmra.mrb[0].mxu0 %v434
        %v574 = vpop.f32.mrb[0].mxu0
        %v575 = vadd.f32 %v317, %v574
        %v576 = vpop.f32.mrb[0].mxu0
        %v577 = vpop.f32.mrb[0].mxu0
        %v578 = vadd.f32 %v317, %v577
        %v579 = vpop.f32.mrb[0].mxu0
        %580 = vmatprep.mubr.bf16.mxu0 0
        %581 = vmatmul.mubr.bf16.gmra.mrb[0].mxu0 %v437
        %v582 = vpop.f32.mrb[0].mxu0
        %v583 = vadd.f32 %v317, %v582
        %v584 = vpop.f32.mrb[0].mxu0
        %v585 = vpop.f32.mrb[0].mxu0
        %v586 = vadd.f32 %v317, %v585
        %v587 = vpop.f32.mrb[0].mxu0
        %588 = vmatprep.mubr.bf16.mxu0 0
        %589 = vmatmul.mubr.bf16.gmra.mrb[0].mxu0 %v440
        %v590 = vpop.f32.mrb[0].mxu0
        %v591 = vadd.f32 %v317, %v590
        %v592 = vpop.f32.mrb[0].mxu0
        %v593 = vpop.f32.mrb[0].mxu0
        %v594 = vadd.f32 %v317, %v593
        %v595 = vpop.f32.mrb[0].mxu0
        %596 = vmatprep.mubr.bf16.mxu0 0
        %597 = vmatmul.mubr.bf16.gmra.mrb[0].mxu0 %v443
        %v598 = vpop.f32.mrb[0].mxu0
        %v599 = vadd.f32 %v317, %v598
        %v600 = vpop.f32.mrb[0].mxu0
        %v601 = vpop.f32.mrb[0].mxu0
        %v602 = vadd.f32 %v317, %v601
        %v603 = vpop.f32.mrb[0].mxu0
        %604 = vmatprep.mubr.bf16.mxu0 0
        %605 = vmatmul.mubr.bf16.gmra.mrb[0].mxu0 %v446
        %v606 = vpop.f32.mrb[0].mxu0
        %v607 = vadd.f32 %v317, %v606
        %v608 = vpop.f32.mrb[0].mxu0
        %v609 = vpop.f32.mrb[0].mxu0
        %v610 = vadd.f32 %v317, %v609
        %v611 = vpop.f32.mrb[0].mxu0
        %612 = vdwg.mxu0
        %v613 = vpack.c.bf16 %v490, %v487
        %v614 = vpack.c.bf16 %v498, %v495
        %v615 = vpack.c.bf16 %v506, %v503
        %v616 = vpack.c.bf16 %v514, %v511
        %v617 = vpack.c.bf16 %v522, %v519
        %v618 = vpack.c.bf16 %v530, %v527
        %v619 = vpack.c.bf16 %v538, %v535
        %v620 = vpack.c.bf16 %v546, %v543
        %v621 = vpack.c.bf16 %v554, %v551
        %v622 = vpack.c.bf16 %v562, %v559
        %v623 = vpack.c.bf16 %v570, %v567
        %v624 = vpack.c.bf16 %v578, %v575
        %v625 = vpack.c.bf16 %v586, %v583
        %v626 = vpack.c.bf16 %v594, %v591
        %v627 = vpack.c.bf16 %v602, %v599
        %v628 = vpack.c.bf16 %v610, %v607
        %v645 = vunpack.c.l.b16 %v613
        %v646 = vunpack.c.h.b16 %v613
        %v647 = vunpack.c.l.b16 %v614
        %v648 = vunpack.c.h.b16 %v614
        %v649 = vunpack.c.l.b16 %v615
        %v650 = vunpack.c.h.b16 %v615
        %v651 = vunpack.c.l.b16 %v616
        %v652 = vunpack.c.h.b16 %v616
        %v653 = vunpack.c.l.b16 %v617
        %v654 = vunpack.c.h.b16 %v617
        %v655 = vunpack.c.l.b16 %v618
        %v656 = vunpack.c.h.b16 %v618
        %v657 = vunpack.c.l.b16 %v619
        %v658 = vunpack.c.h.b16 %v619
        %v659 = vunpack.c.l.b16 %v620
        %v660 = vunpack.c.h.b16 %v620
        %v661 = vunpack.c.l.b16 %v621
        %v662 = vunpack.c.h.b16 %v621
        %v663 = vunpack.c.l.b16 %v622
        %v664 = vunpack.c.h.b16 %v622
        %v665 = vunpack.c.l.b16 %v623
        %v666 = vunpack.c.h.b16 %v623
        %v667 = vunpack.c.l.b16 %v624
        %v668 = vunpack.c.h.b16 %v624
        %v669 = vunpack.c.l.b16 %v625
        %v670 = vunpack.c.h.b16 %v625
        %v671 = vunpack.c.l.b16 %v626
        %v672 = vunpack.c.h.b16 %v626
        %v673 = vunpack.c.l.b16 %v627
        %v674 = vunpack.c.h.b16 %v627
        %v675 = vunpack.c.l.b16 %v628
        %v676 = vunpack.c.h.b16 %v628
        %v677 = vpack.c.b16 %v645, %v645
        %v678 = vpack.c.b16 %v646, %v646
        %v679 = vpack.c.b16 %v647, %v647
        %v680 = vpack.c.b16 %v648, %v648
        %v681 = vpack.c.b16 %v649, %v649
        %v682 = vpack.c.b16 %v650, %v650
        %v683 = vpack.c.b16 %v651, %v651
        %v684 = vpack.c.b16 %v652, %v652
        %v685 = vpack.c.b16 %v653, %v653
        %v686 = vpack.c.b16 %v654, %v654
        %v687 = vpack.c.b16 %v655, %v655
        %v688 = vpack.c.b16 %v656, %v656
        %v689 = vpack.c.b16 %v657, %v657
        %v690 = vpack.c.b16 %v658, %v658
        %v691 = vpack.c.b16 %v659, %v659
        %v692 = vpack.c.b16 %v660, %v660
        %v693 = vpack.c.b16 %v661, %v661
        %v694 = vpack.c.b16 %v662, %v662
        %v695 = vpack.c.b16 %v663, %v663
        %v696 = vpack.c.b16 %v664, %v664
        %v697 = vpack.c.b16 %v665, %v665
        %v698 = vpack.c.b16 %v666, %v666
        %v699 = vpack.c.b16 %v667, %v667
        %v700 = vpack.c.b16 %v668, %v668
        %v701 = vpack.c.b16 %v669, %v669
        %v702 = vpack.c.b16 %v670, %v670
        %v703 = vpack.c.b16 %v671, %v671
        %v704 = vpack.c.b16 %v672, %v672
        %v705 = vpack.c.b16 %v673, %v673
        %v706 = vpack.c.b16 %v674, %v674
        %v707 = vpack.c.b16 %v675, %v675
        %v708 = vpack.c.b16 %v676, %v676
        %vm741 = vcmask 60416
        %742 = vst.msk [vmem:[%s275] sm:$0xf] %vm741, %v677
        %743 = vst.msk [vmem:[%s275 + $0x4] sm:$0xf] %vm741, %v678
        %744 = vst.msk [vmem:[%s275 + $0x8] sm:$0xf] %vm741, %v679
        %745 = vst.msk [vmem:[%s275 + $0xc] sm:$0xf] %vm741, %v680
        %746 = vst.msk [vmem:[%s275 + $0x10] sm:$0xf] %vm741, %v681
        %747 = vst.msk [vmem:[%s275 + $0x14] sm:$0xf] %vm741, %v682
        %748 = vst.msk [vmem:[%s275 + $0x18] sm:$0xf] %vm741, %v683
        %749 = vst.msk [vmem:[%s275 + $0x1c] sm:$0xf] %vm741, %v684
        %750 = vst.msk [vmem:[%s275 + $0x20] sm:$0xf] %vm741, %v685
        %751 = vst.msk [vmem:[%s275 + $0x24] sm:$0xf] %vm741, %v686
        %752 = vst.msk [vmem:[%s275 + $0x28] sm:$0xf] %vm741, %v687
        %753 = vst.msk [vmem:[%s275 + $0x2c] sm:$0xf] %vm741, %v688
        %754 = vst.msk [vmem:[%s275 + $0x30] sm:$0xf] %vm741, %v689
        %755 = vst.msk [vmem:[%s275 + $0x34] sm:$0xf] %vm741, %v690
        %756 = vst.msk [vmem:[%s275 + $0x38] sm:$0xf] %vm741, %v691
        %757 = vst.msk [vmem:[%s275 + $0x3c] sm:$0xf] %vm741, %v692
        %758 = vst.msk [vmem:[%s275 + $0x40] sm:$0xf] %vm741, %v693
        %759 = vst.msk [vmem:[%s275 + $0x44] sm:$0xf] %vm741, %v694
        %760 = vst.msk [vmem:[%s275 + $0x48] sm:$0xf] %vm741, %v695
        %761 = vst.msk [vmem:[%s275 + $0x4c] sm:$0xf] %vm741, %v696
        %762 = vst.msk [vmem:[%s275 + $0x50] sm:$0xf] %vm741, %v697
        %763 = vst.msk [vmem:[%s275 + $0x54] sm:$0xf] %vm741, %v698
        %764 = vst.msk [vmem:[%s275 + $0x58] sm:$0xf] %vm741, %v699
        %765 = vst.msk [vmem:[%s275 + $0x5c] sm:$0xf] %vm741, %v700
        %766 = vst.msk [vmem:[%s275 + $0x60] sm:$0xf] %vm741, %v701
        %767 = vst.msk [vmem:[%s275 + $0x64] sm:$0xf] %vm741, %v702
        %768 = vst.msk [vmem:[%s275 + $0x68] sm:$0xf] %vm741, %v703
        %769 = vst.msk [vmem:[%s275 + $0x6c] sm:$0xf] %vm741, %v704
        %770 = vst.msk [vmem:[%s275 + $0x70] sm:$0xf] %vm741, %v705
        %771 = vst.msk [vmem:[%s275 + $0x74] sm:$0xf] %vm741, %v706
        %772 = vst.msk [vmem:[%s275 + $0x78] sm:$0xf] %vm741, %v707
        %773 = vst.msk [vmem:[%s275 + $0x7c] sm:$0xf] %vm741, %v708
        %v774 = vld [vmem:[%s3] sm:$0x3]
        %v776 = vsel %vm399, %v774, 0
        %778 = vmatprep.subr.bf16.mxu0 0
        %779 = vmatpush1.bf16.xpose.msra.mxu0 %v401
        %780 = vmatprep.subr.bf16.mxu0 0
        %781 = vmatpush1.bf16.xpose.msra.mxu0 %v404
        %782 = vmatprep.subr.bf16.mxu0 0
        %783 = vmatpush1.bf16.xpose.msra.mxu0 %v407
        %784 = vmatprep.subr.bf16.mxu0 0
        %785 = vmatpush1.bf16.xpose.msra.mxu0 %v410
        %786 = vmatprep.subr.bf16.mxu0 0
        %787 = vmatpush1.bf16.xpose.msra.mxu0 %v413
        %788 = vmatprep.subr.bf16.mxu0 0
        %789 = vmatpush1.bf16.xpose.msra.mxu0 %v416
        %790 = vmatprep.subr.bf16.mxu0 0
        %791 = vmatpush1.bf16.xpose.msra.mxu0 %v419
        %792 = vmatprep.subr.bf16.mxu0 0
        %793 = vmatpush1.bf16.xpose.msra.mxu0 %v422
        %794 = vmatprep.subr.bf16.mxu0 0
        %795 = vmatpush1.bf16.xpose.msra.mxu0 %v425
        %796 = vmatprep.subr.bf16.mxu0 0
        %797 = vmatpush1.bf16.xpose.msra.mxu0 %v428
        %798 = vmatprep.subr.bf16.mxu0 0
        %799 = vmatpush1.bf16.xpose.msra.mxu0 %v431
        %800 = vmatprep.subr.bf16.mxu0 0
        %801 = vmatpush1.bf16.xpose.msra.mxu0 %v434
        %802 = vmatprep.subr.bf16.mxu0 0
        %803 = vmatpush1.bf16.xpose.msra.mxu0 %v437
        %804 = vmatprep.subr.bf16.mxu0 0
        %805 = vmatpush1.bf16.xpose.msra.mxu0 %v440
        %806 = vmatprep.subr.bf16.mxu0 0
        %807 = vmatpush1.bf16.xpose.msra.mxu0 %v443
        %808 = vmatprep.subr.bf16.mxu0 0
        %809 = vmatpush1.bf16.xpose.msra.mxu0 %v446
        %810 = vmatprep.mubr.bf16.mxu0 0
        %811 = vmatmul.mubr.bf16.gmra.mrb[0].mxu0 %v776
        %v812 = vpop.f32.mrb[0].mxu0
        %v813 = vadd.f32 0.0, %v812
        %v814 = vpop.f32.mrb[0].mxu0
        %v815 = vadd.f32 0.0, %v814
        %v816 = vpop.f32.mrb[0].mxu0
        %v817 = vpop.f32.mrb[0].mxu0
        %818 = vdwg.mxu0
        %v819 = vpack.c.bf16 %v813, %v813
        %v820 = vpack.c.bf16 %v815, %v815
        %v823 = vcombine.low %v819, %v820
        %v825 = vunpack.c.l.s4 1983009808
        %v826 = vunpack.c.0.s8 %v825
        %v827 = vlaneseq
        %v828 = vshrl.u32 %v827, 7
        %v829 = vsub.s32 %v826, %v828
        %v830 = vrot.slane %v823, %v829
        %832 = vst [vmem:[%s256] sm:$0xf] %v830
        %s833 = smul.u32 32, %s25
        %p834 = scmp.lt.s32.totalorder %s24, 1
        %s835 = scalar_select %p834, %s24, 1
        %p836 = scmp.lt.s32.totalorder %s833, 31
        %s837 = scalar_select %p836, %s833, 31
        %s838 = smul.addr %s835, 32
        %s839 = sadd.s32 %s837, %s838
        %s840 = smul.addr %s839, 4
        %s841 = scalar_lea.vmem %s4, %s840
        %s842 = sand.u32 %s161, 1
        %s843 = scalar_lea.sflag [#allocation3], %s842
        %s844 = sand.u32 %s161, 1
        %s845 = smul.addr %s844, 4
        %s846 = scalar_lea.vmem [#allocation2], %s845
        // Predicated region
        $region37: #{tpu_custom_call.1} parent=35 // pred_check
          %p847 = pneg %p143
        $region38: #{tpu_custom_call.1} parent=35 // pred_check_branch
          %849 = sbr.rel (%p847) target = $region40
        $region39: #{tpu_custom_call.1} parent=35 // pred_region
          %s850 = smul.u32 32, %s25
        $region40: #{tpu_custom_call.1} parent=35 // pred_fallthru
          _
        // Predicated region
        $region41: #{tpu_custom_call.1} parent=35 // pred_check
          %p851 = pneg %p171
        $region42: #{tpu_custom_call.1} parent=35 // pred_check_branch
          %853 = sbr.rel (%p851) target = $region44
        $region43: #{tpu_custom_call.1} parent=35 // pred_region
          %s854 = smul.u32 2, %s25
          %s856 = ssub.s32 64, 64
          %857 = vsyncadd %s843, %s856
          %s858 = smul.addr %s24, 2
          %s859 = sadd.s32 %s854, %s858
          %s860 = smul.addr %s859, 32
          %s861 = scalar_lea.hbm %s5, %s860
          %s863 = sshll.u32 %s846, 4
          %s864 = int_to_ptr.vmem [resolvable:$true] %s863
          %866 = dma.vmem_to_hbm [thread:$0]  %s864, 64, %s861, %s843
        $region44: #{tpu_custom_call.1} parent=35 // pred_fallthru
          _
      $region36: #{tpu_custom_call.1} parent=5 // pred_fallthru
        _
      %p867 = scmp.le.s32.totalorder 2, %s15
      // Predicated region
      $region45: #{tpu_custom_call.1} parent=5 // pred_check
        %p868 = pneg %p867
      $region46: #{tpu_custom_call.1} parent=5 // pred_check_branch
        %870 = sbr.rel (%p868) target = $region48
      $region47: #{tpu_custom_call.1} parent=5 // pred_region
        %s871 = ssub.s32 %s15, 2
        // Predicated region
        $region49: #{tpu_custom_call.1} parent=47 // pred_check
          %p872 = pneg %p149
        $region50: #{tpu_custom_call.1} parent=47 // pred_check_branch
          %874 = sbr.rel (%p872) target = $region52
        $region51: #{tpu_custom_call.1} parent=47 // pred_region
          %s875 = smul.u32 32, %s27
          %p876 = scmp.lt.s32.totalorder %s26, 1
          %s877 = scalar_select %p876, %s26, 1
          %p878 = scmp.lt.s32.totalorder %s875, 31
          %s879 = scalar_select %p878, %s875, 31
          %s880 = smul.addr %s877, 32
          %s881 = sadd.s32 %s879, %s880
          %s882 = smul.addr %s881, 4
          %s883 = scalar_lea.vmem %s4, %s882
        $region52: #{tpu_custom_call.1} parent=47 // pred_fallthru
          _
        // Predicated region
        $region53: #{tpu_custom_call.1} parent=47 // pred_check
          %p884 = pneg %p177
        $region54: #{tpu_custom_call.1} parent=47 // pred_check_branch
          %886 = sbr.rel (%p884) target = $region56
        $region55: #{tpu_custom_call.1} parent=47 // pred_region
          %s887 = sand.u32 %s162, 1
          %s888 = scalar_lea.sflag [#allocation3], %s887
          %s889 = sand.u32 %s162, 1
          %s890 = smul.addr %s889, 4
          %s891 = scalar_lea.vmem [#allocation2], %s890
          %892 = dma.done %s888, 64
        $region56: #{tpu_custom_call.1} parent=47 // pred_fallthru
          _
      $region48: #{tpu_custom_call.1} parent=5 // pred_fallthru
        _
    $region6: #{tpu_custom_call.1} parent=1 // loop_footer
      %s19 = sadd.s32 1, %s15
    $region7: #{tpu_custom_call.1} parent=1 // loop_footer_branch
      %14 = sbr.rel target = $region3
    $region8: #{tpu_custom_call.1} parent=1 // loop_exit
      _
    %893 = vsyncpa [#allocation3], 1
    %s894 = scalar_lea.sflag [#allocation3], 1
    %895 = vsyncpa %s894, 1

</llo_original>
